<compile_context>
chip_gen: v5e
topology: v5e:2x2
jax: 0.10.0
libtpu: 0.0.40
codegen_flags: <defaults>
</compile_context>

<pallas_src>
import math

import jax
import jax.numpy as jnp
from jax.experimental import pallas as pl
from jax.experimental.pallas import tpu as pltpu


def _gcn_resblock_kernel(adj_ref, wb1_ref, lb1_ref, b1_ref,
                         wb2_ref, lb2_ref, b2_ref, x_ref, out_ref):
    """Whole residual block, batch folded into the lane (last) dimension.

    adj_ref:  (N, N)        dense adjacency
    wb1_ref:  (B*F, B*H)    kron(I_B, W1)
    lb1_ref:  (B*F, B*H)    kron(I_B, L1)
    b1_ref:   (1, B*H)      tiled bias 1
    wb2_ref:  (B*H, B*F)    kron(I_B, W2)
    lb2_ref:  (B*H, B*F)    kron(I_B, L2)
    b2_ref:   (1, B*F)      tiled bias 2
    x_ref:    (N, B*F)      shape_verts, batch-major in lanes: x_ref[n, b*F+f] = x[b, n, f]
    out_ref:  (N, B*F)
    """
    adj = adj_ref[...]
    x = x_ref[...]

    # --- conv1 (reassociated): h = (adj @ x) @ W1 + x @ L1 + b1 ; ReLU ---
    ax = jnp.dot(adj, x, preferred_element_type=jnp.float32)            # (N, B*F)
    h = (jnp.dot(ax, wb1_ref[...], preferred_element_type=jnp.float32)
         + jnp.dot(x, lb1_ref[...], preferred_element_type=jnp.float32)
         + b1_ref[...])                                                  # (N, B*H)
    h = jnp.maximum(h, 0.0)

    # --- conv2: y = adj @ (h @ W2) + h @ L2 + b2 ; ReLU ---
    hw2 = jnp.dot(h, wb2_ref[...], preferred_element_type=jnp.float32)   # (N, B*F)
    hl2 = jnp.dot(h, lb2_ref[...], preferred_element_type=jnp.float32)   # (N, B*F)
    y = (jnp.dot(adj, hw2, preferred_element_type=jnp.float32)
         + hl2 + b2_ref[...])
    y = jnp.maximum(y, 0.0)

    # --- residual average ---
    out_ref[...] = ((x + y) * 0.5).astype(out_ref.dtype)


def graph_conv_res_block(shape_verts, adj, w1, l1, b1, w2, l2, b2):
    """shape_verts: [B, N, F] float32 -> [B, N, F] float32."""
    B, N, F = shape_verts.shape
    H = w1.shape[1]
    assert adj.shape == (N, N)
    assert w1.shape == (F, H) and l1.shape == (F, H) and b1.shape == (H,)
    assert w2.shape == (H, F) and l2.shape == (H, F) and b2.shape == (F,)

    dtype = shape_verts.dtype

    # Wrapper-side layout plumbing (tiny, done once per call / constant-folded under jit):
    # fold batch into lanes via block-diagonal weights so the kernel is pure 2-D matmuls.
    eye_b = jnp.eye(B, dtype=dtype)
    wb1 = jnp.kron(eye_b, w1)                     # (B*F, B*H)
    lb1 = jnp.kron(eye_b, l1)                     # (B*F, B*H)
    wb2 = jnp.kron(eye_b, w2)                     # (B*H, B*F)
    lb2 = jnp.kron(eye_b, l2)                     # (B*H, B*F)
    b1b = jnp.tile(b1, B).reshape(1, B * H)
    b2b = jnp.tile(b2, B).reshape(1, B * F)

    # (B, N, F) -> (N, B*F) with xm[n, b*F+f] = x[b, n, f]
    xm = jnp.transpose(shape_verts, (1, 0, 2)).reshape(N, B * F)

    # Advisory cost estimate (logical flops of the unfused reference).
    flops = B * (4 * N * N * F + 8 * N * F * H)
    bytes_accessed = 4 * (N * N + 4 * (B * F) * (B * H) + B * H + B * F
                          + 2 * N * B * F)
    cost = pl.CostEstimate(flops=flops, transcendentals=0,
                           bytes_accessed=bytes_accessed)

    grid_spec = pltpu.PrefetchScalarGridSpec(
        num_scalar_prefetch=0,
        grid=(1,),  # single step: whole problem resident, no pipeline overhead
        in_specs=[
            pl.BlockSpec((N, N), lambda i: (0, 0)),             # adj
            pl.BlockSpec((B * F, B * H), lambda i: (0, 0)),     # kron(I, W1)
            pl.BlockSpec((B * F, B * H), lambda i: (0, 0)),     # kron(I, L1)
            pl.BlockSpec((1, B * H), lambda i: (0, 0)),         # b1
            pl.BlockSpec((B * H, B * F), lambda i: (0, 0)),     # kron(I, W2)
            pl.BlockSpec((B * H, B * F), lambda i: (0, 0)),     # kron(I, L2)
            pl.BlockSpec((1, B * F), lambda i: (0, 0)),         # b2
            pl.BlockSpec((N, B * F), lambda i: (0, 0)),         # x slab
        ],
        out_specs=pl.BlockSpec((N, B * F), lambda i: (0, 0)),
    )

    out_m = pl.pallas_call(
        _gcn_resblock_kernel,
        out_shape=jax.ShapeDtypeStruct((N, B * F), dtype),
        grid_spec=grid_spec,
        compiler_params=pltpu.CompilerParams(
            dimension_semantics=("arbitrary",),
            vmem_limit_bytes=16 * 1024 * 1024,   # tiny problem; safe on v5e/v6e/v7x
        ),
        cost_estimate=cost,
    )(adj, wb1, lb1, b1b, wb2, lb2, b2b, xm)

    # (N, B*F) -> (B, N, F)
    return jnp.transpose(out_m.reshape(N, B, F), (1, 0, 2))


def _xavier_uniform(key, shape, dtype=jnp.float32):
    fan_in, fan_out = shape
    bound = math.sqrt(6.0 / (fan_in + fan_out))
    return jax.random.uniform(key, shape, dtype, minval=-bound, maxval=bound)


def _reference(shape_verts, adj, w1, l1, b1, w2, l2, b2):
    """Plain-JAX reference mirroring the PyTorch module (unfused, original order)."""
    x = shape_verts
    h = jnp.matmul(adj, jnp.matmul(x, w1)) + jnp.matmul(x, l1) + b1
    h = jnp.maximum(h, 0.0)
    y = jnp.matmul(adj, jnp.matmul(h, w2)) + jnp.matmul(h, l2) + b2
    y = jnp.maximum(y, 0.0)
    return (x + y) * 0.5


if __name__ == "__main__":
    # Small shapes consistent with the module: verts have 3 coords.
    B, N, F_IN, HIDDEN = 2, 16, 3, 32

    key = jax.random.PRNGKey(0)
    k_x, k_w1, k_l1, k_w2, k_l2, _ = jax.random.split(key, 6)

    shape_verts = jax.random.normal(k_x, (B, N, F_IN), dtype=jnp.float32)

    # Deterministic dense adjacency: ring graph with self loops, row-normalized.
    eye = jnp.eye(N, dtype=jnp.float32)
    ring = jnp.roll(eye, 1, axis=1) + jnp.roll(eye, -1, axis=1)
    adj = eye + ring
    adj = adj / jnp.sum(adj, axis=1, keepdims=True)

    # Parameters (xavier-uniform weights, zero biases) -- synthetic, deterministic.
    w1 = _xavier_uniform(k_w1, (F_IN, HIDDEN))
    l1 = _xavier_uniform(k_l1, (F_IN, HIDDEN))
    b1 = jnp.zeros((HIDDEN,), jnp.float32)
    w2 = _xavier_uniform(k_w2, (HIDDEN, F_IN))
    l2 = _xavier_uniform(k_l2, (HIDDEN, F_IN))
    b2 = jnp.zeros((F_IN,), jnp.float32)

    out = graph_conv_res_block(shape_verts, adj, w1, l1, b1, w2, l2, b2)
    out = jax.block_until_ready(out)

    ref = _reference(shape_verts, adj, w1, l1, b1, w2, l2, b2)
    assert out.shape == (B, N, F_IN)
    assert jnp.allclose(out, ref, atol=1e-5, rtol=1e-4), "mismatch vs reference"

    print("KERNEL_OK")
</pallas_src>

<mosaic_0001>
module attributes {stable_mosaic.version = 11 : i64} {
  func.func @_gcn_resblock_kernel(%arg0: i32, %arg1: memref<16x16xf32, #tpu.memory_space<vmem>>, %arg2: memref<6x64xf32, #tpu.memory_space<vmem>>, %arg3: memref<6x64xf32, #tpu.memory_space<vmem>>, %arg4: memref<1x64xf32, #tpu.memory_space<vmem>>, %arg5: memref<64x6xf32, #tpu.memory_space<vmem>>, %arg6: memref<64x6xf32, #tpu.memory_space<vmem>>, %arg7: memref<1x6xf32, #tpu.memory_space<vmem>>, %arg8: memref<16x6xf32, #tpu.memory_space<vmem>>, %arg9: memref<16x6xf32, #tpu.memory_space<vmem>>) attributes {dimension_semantics = [#tpu.dimension_semantics<arbitrary>], iteration_bounds = array<i64: 1>, scalar_prefetch = 0 : i64, scratch_operands = 0 : i64, tpu.core_type = #tpu.core_type<tc>, window_params = [{pipeline_mode = #tpu.pipeline_mode<synchronous>, transform_indices = @transform_0, window_bounds = array<i64: 16, 16>}, {pipeline_mode = #tpu.pipeline_mode<synchronous>, transform_indices = @transform_1, window_bounds = array<i64: 6, 64>}, {pipeline_mode = #tpu.pipeline_mode<synchronous>, transform_indices = @transform_2, window_bounds = array<i64: 6, 64>}, {pipeline_mode = #tpu.pipeline_mode<synchronous>, transform_indices = @transform_3, window_bounds = array<i64: 1, 64>}, {pipeline_mode = #tpu.pipeline_mode<synchronous>, transform_indices = @transform_4, window_bounds = array<i64: 64, 6>}, {pipeline_mode = #tpu.pipeline_mode<synchronous>, transform_indices = @transform_5, window_bounds = array<i64: 64, 6>}, {pipeline_mode = #tpu.pipeline_mode<synchronous>, transform_indices = @transform_6, window_bounds = array<i64: 1, 6>}, {pipeline_mode = #tpu.pipeline_mode<synchronous>, transform_indices = @transform_7, window_bounds = array<i64: 16, 6>}, {pipeline_mode = #tpu.pipeline_mode<synchronous>, transform_indices = @transform_8, window_bounds = array<i64: 16, 6>}]} {
    %c0 = arith.constant 0 : index
    %c0_0 = arith.constant 0 : index
    %0 = vector.load %arg1[%c0, %c0_0] : memref<16x16xf32, #tpu.memory_space<vmem>>, vector<16x16xf32>
    %c0_1 = arith.constant 0 : index
    %c0_2 = arith.constant 0 : index
    %1 = vector.load %arg8[%c0_1, %c0_2] : memref<16x6xf32, #tpu.memory_space<vmem>>, vector<16x6xf32>
    %cst = arith.constant dense<0.000000e+00> : vector<16x6xf32>
    %2 = tpu.matmul %0, %1, %cst {dimension_numbers = #tpu.dot_dimension_numbers<[1], [0], [0], [1], [0, 0, 1, 1], [], []>} : vector<16x16xf32>, vector<16x6xf32>, vector<16x6xf32> -> vector<16x6xf32>
    %c0_3 = arith.constant 0 : index
    %c0_4 = arith.constant 0 : index
    %3 = vector.load %arg2[%c0_3, %c0_4] : memref<6x64xf32, #tpu.memory_space<vmem>>, vector<6x64xf32>
    %cst_5 = arith.constant dense<0.000000e+00> : vector<16x64xf32>
    %4 = tpu.matmul %2, %3, %cst_5 {dimension_numbers = #tpu.dot_dimension_numbers<[1], [0], [0], [1], [0, 0, 1, 1], [], []>} : vector<16x6xf32>, vector<6x64xf32>, vector<16x64xf32> -> vector<16x64xf32>
    %c0_6 = arith.constant 0 : index
    %c0_7 = arith.constant 0 : index
    %5 = vector.load %arg3[%c0_6, %c0_7] : memref<6x64xf32, #tpu.memory_space<vmem>>, vector<6x64xf32>
    %cst_8 = arith.constant dense<0.000000e+00> : vector<16x64xf32>
    %6 = tpu.matmul %1, %5, %cst_8 {dimension_numbers = #tpu.dot_dimension_numbers<[1], [0], [0], [1], [0, 0, 1, 1], [], []>} : vector<16x6xf32>, vector<6x64xf32>, vector<16x64xf32> -> vector<16x64xf32>
    %7 = arith.addf %4, %6 : vector<16x64xf32>
    %c0_9 = arith.constant 0 : index
    %c0_10 = arith.constant 0 : index
    %8 = vector.load %arg4[%c0_9, %c0_10] : memref<1x64xf32, #tpu.memory_space<vmem>>, vector<1x64xf32>
    %9 = vector.broadcast %8 : vector<1x64xf32> to vector<16x64xf32>
    %10 = arith.addf %7, %9 : vector<16x64xf32>
    %cst_11 = arith.constant 0.000000e+00 : f32
    %11 = vector.broadcast %cst_11 : f32 to vector<16x64xf32>
    %12 = arith.maximumf %10, %11 : vector<16x64xf32>
    %c0_12 = arith.constant 0 : index
    %c0_13 = arith.constant 0 : index
    %13 = vector.load %arg5[%c0_12, %c0_13] : memref<64x6xf32, #tpu.memory_space<vmem>>, vector<64x6xf32>
    %cst_14 = arith.constant dense<0.000000e+00> : vector<16x6xf32>
    %14 = tpu.matmul %12, %13, %cst_14 {dimension_numbers = #tpu.dot_dimension_numbers<[1], [0], [0], [1], [0, 0, 1, 1], [], []>} : vector<16x64xf32>, vector<64x6xf32>, vector<16x6xf32> -> vector<16x6xf32>
    %c0_15 = arith.constant 0 : index
    %c0_16 = arith.constant 0 : index
    %15 = vector.load %arg6[%c0_15, %c0_16] : memref<64x6xf32, #tpu.memory_space<vmem>>, vector<64x6xf32>
    %cst_17 = arith.constant dense<0.000000e+00> : vector<16x6xf32>
    %16 = tpu.matmul %12, %15, %cst_17 {dimension_numbers = #tpu.dot_dimension_numbers<[1], [0], [0], [1], [0, 0, 1, 1], [], []>} : vector<16x64xf32>, vector<64x6xf32>, vector<16x6xf32> -> vector<16x6xf32>
    %cst_18 = arith.constant dense<0.000000e+00> : vector<16x6xf32>
    %17 = tpu.matmul %0, %14, %cst_18 {dimension_numbers = #tpu.dot_dimension_numbers<[1], [0], [0], [1], [0, 0, 1, 1], [], []>} : vector<16x16xf32>, vector<16x6xf32>, vector<16x6xf32> -> vector<16x6xf32>
    %18 = arith.addf %17, %16 : vector<16x6xf32>
    %c0_19 = arith.constant 0 : index
    %c0_20 = arith.constant 0 : index
    %19 = vector.load %arg7[%c0_19, %c0_20] : memref<1x6xf32, #tpu.memory_space<vmem>>, vector<1x6xf32>
    %20 = vector.broadcast %19 : vector<1x6xf32> to vector<16x6xf32>
    %21 = arith.addf %18, %20 : vector<16x6xf32>
    %cst_21 = arith.constant 0.000000e+00 : f32
    %22 = vector.broadcast %cst_21 : f32 to vector<16x6xf32>
    %23 = arith.maximumf %21, %22 : vector<16x6xf32>
    %24 = arith.addf %1, %23 : vector<16x6xf32>
    %cst_22 = arith.constant 5.000000e-01 : f32
    %25 = vector.broadcast %cst_22 : f32 to vector<16x6xf32>
    %26 = arith.mulf %24, %25 : vector<16x6xf32>
    %c0_23 = arith.constant 0 : index
    %c0_24 = arith.constant 0 : index
    %27 = vector.load %arg9[%c0_23, %c0_24] : memref<16x6xf32, #tpu.memory_space<vmem>>, vector<16x6xf32>
    tpu.vector_store %arg9[%c0_23, %c0_24], %26 {strides = array<i32>} : memref<16x6xf32, #tpu.memory_space<vmem>>, vector<16x6xf32>,
    return
  }
  func.func @transform_0(%arg0: i32) -> (i32, i32) {
    %c0_i32 = arith.constant 0 : i32
    %c0_i32_0 = arith.constant 0 : i32
    %c0_i32_1 = arith.constant 0 : i32
    return %c0_i32, %c0_i32_0 : i32, i32
  }
  func.func @transform_1(%arg0: i32) -> (i32, i32) {
    %c0_i32 = arith.constant 0 : i32
    %c0_i32_0 = arith.constant 0 : i32
    %c0_i32_1 = arith.constant 0 : i32
    return %c0_i32, %c0_i32_0 : i32, i32
  }
  func.func @transform_2(%arg0: i32) -> (i32, i32) {
    %c0_i32 = arith.constant 0 : i32
    %c0_i32_0 = arith.constant 0 : i32
    %c0_i32_1 = arith.constant 0 : i32
    return %c0_i32, %c0_i32_0 : i32, i32
  }
  func.func @transform_3(%arg0: i32) -> (i32, i32) {
    %c0_i32 = arith.constant 0 : i32
    %c0_i32_0 = arith.constant 0 : i32
    %c0_i32_1 = arith.constant 0 : i32
    return %c0_i32, %c0_i32_0 : i32, i32
  }
  func.func @transform_4(%arg0: i32) -> (i32, i32) {
    %c0_i32 = arith.constant 0 : i32
    %c0_i32_0 = arith.constant 0 : i32
    %c0_i32_1 = arith.constant 0 : i32
    return %c0_i32, %c0_i32_0 : i32, i32
  }
  func.func @transform_5(%arg0: i32) -> (i32, i32) {
    %c0_i32 = arith.constant 0 : i32
    %c0_i32_0 = arith.constant 0 : i32
    %c0_i32_1 = arith.constant 0 : i32
    return %c0_i32, %c0_i32_0 : i32, i32
  }
  func.func @transform_6(%arg0: i32) -> (i32, i32) {
    %c0_i32 = arith.constant 0 : i32
    %c0_i32_0 = arith.constant 0 : i32
    %c0_i32_1 = arith.constant 0 : i32
    return %c0_i32, %c0_i32_0 : i32, i32
  }
  func.func @transform_7(%arg0: i32) -> (i32, i32) {
    %c0_i32 = arith.constant 0 : i32
    %c0_i32_0 = arith.constant 0 : i32
    %c0_i32_1 = arith.constant 0 : i32
    return %c0_i32, %c0_i32_0 : i32, i32
  }
  func.func @transform_8(%arg0: i32) -> (i32, i32) {
    %c0_i32 = arith.constant 0 : i32
    %c0_i32_0 = arith.constant 0 : i32
    %c0_i32_1 = arith.constant 0 : i32
    return %c0_i32, %c0_i32_0 : i32, i32
  }
}

</mosaic_0001>

<llo_original>
// kernel: tpu_custom_call.1
$region0: #{tpu_custom_call.1}
  #allocation0 [shape = 'u32[]', space=smem, size = 0x4, offset = 0x4, fixed_abs, tag = 'smem constant byte address 0x4 - core index']
  #allocation1 [shape = 'u32[72,128]{1,0:T(1,128)}', space=vmem, size = 0x9000, scoped, tag = 'internal scratch']
  %s0 = inlined_call_operand.vmem [shape: f32[16,16], index: 0, kind: input, shape index: {}]
  %s1 = inlined_call_operand.vmem [shape: f32[6,64], index: 1, kind: input, shape index: {}]
  %s2 = inlined_call_operand.vmem [shape: f32[6,64], index: 2, kind: input, shape index: {}]
  %s3 = inlined_call_operand.vmem [shape: f32[1,64], index: 3, kind: input, shape index: {}]
  %s4 = inlined_call_operand.vmem [shape: f32[64,6], index: 4, kind: input, shape index: {}]
  %s5 = inlined_call_operand.vmem [shape: f32[64,6], index: 5, kind: input, shape index: {}]
  %s6 = inlined_call_operand.vmem [shape: f32[1,6], index: 6, kind: input, shape index: {}]
  %s7 = inlined_call_operand.vmem [shape: f32[16,6], index: 7, kind: input, shape index: {}]
  %s8 = inlined_call_operand.vmem [shape: f32[16,6], index: 8, kind: output, shape index: {}]
  %s9 = sld [smem:[#allocation0]]
  $region42: #{tpu_custom_call.1} parent=0
    _
  %s11 = ssub.s32 1, %s9
  %s12 = scalar_select 0, %s11, %s9
  // Predicated region
  $region2: #{tpu_custom_call.1} parent=0 // pred_check
    _
  $region3: #{tpu_custom_call.1} parent=0 // pred_check_branch
    %14 = sbr.rel (0) target = $region5
  $region4: #{tpu_custom_call.1} parent=0 // pred_region
    _
  $region5: #{tpu_custom_call.1} parent=0 // pred_fallthru
    _
  // Predicated region
  $region6: #{tpu_custom_call.1} parent=0 // pred_check
    _
  $region7: #{tpu_custom_call.1} parent=0 // pred_check_branch
    %16 = sbr.rel (0) target = $region9
  $region8: #{tpu_custom_call.1} parent=0 // pred_region
    _
  $region9: #{tpu_custom_call.1} parent=0 // pred_fallthru
    _
  // Predicated region
  $region10: #{tpu_custom_call.1} parent=0 // pred_check
    _
  $region11: #{tpu_custom_call.1} parent=0 // pred_check_branch
    %18 = sbr.rel (0) target = $region13
  $region12: #{tpu_custom_call.1} parent=0 // pred_region
    _
  $region13: #{tpu_custom_call.1} parent=0 // pred_fallthru
    _
  // Predicated region
  $region14: #{tpu_custom_call.1} parent=0 // pred_check
    _
  $region15: #{tpu_custom_call.1} parent=0 // pred_check_branch
    %20 = sbr.rel (0) target = $region17
  $region16: #{tpu_custom_call.1} parent=0 // pred_region
    _
  $region17: #{tpu_custom_call.1} parent=0 // pred_fallthru
    _
  // Predicated region
  $region18: #{tpu_custom_call.1} parent=0 // pred_check
    _
  $region19: #{tpu_custom_call.1} parent=0 // pred_check_branch
    %22 = sbr.rel (0) target = $region21
  $region20: #{tpu_custom_call.1} parent=0 // pred_region
    _
  $region21: #{tpu_custom_call.1} parent=0 // pred_fallthru
    _
  // Predicated region
  $region22: #{tpu_custom_call.1} parent=0 // pred_check
    _
  $region23: #{tpu_custom_call.1} parent=0 // pred_check_branch
    %24 = sbr.rel (0) target = $region25
  $region24: #{tpu_custom_call.1} parent=0 // pred_region
    _
  $region25: #{tpu_custom_call.1} parent=0 // pred_fallthru
    _
  // Predicated region
  $region26: #{tpu_custom_call.1} parent=0 // pred_check
    _
  $region27: #{tpu_custom_call.1} parent=0 // pred_check_branch
    %26 = sbr.rel (0) target = $region29
  $region28: #{tpu_custom_call.1} parent=0 // pred_region
    _
  $region29: #{tpu_custom_call.1} parent=0 // pred_fallthru
    _
  // Predicated region
  $region30: #{tpu_custom_call.1} parent=0 // pred_check
    _
  $region31: #{tpu_custom_call.1} parent=0 // pred_check_branch
    %28 = sbr.rel (0) target = $region33
  $region32: #{tpu_custom_call.1} parent=0 // pred_region
    _
  $region33: #{tpu_custom_call.1} parent=0 // pred_fallthru
    _
  %v29 = vld [vmem:[%s0] sm:$0xff]
  %v30 = vld [vmem:[%s0 + $0x8] sm:$0xff]
  %v31 = vld [vmem:[%s7] sm:$0xff]
  %v32 = vld [vmem:[%s7 + $0x8] sm:$0xff]
  %vm33 = vcmask 130048
  %v35 = vsel %vm33, %v29, 0
  %v38 = vsel %vm33, %v30, 0
  %40 = vmatpush.msra.mxu0 0.0
  %41 = vmatpush.msra.mxu0 0.0
  %42 = vmatpush.msra.mxu0 0.0
  %43 = vmatpush.msra.mxu0 0.0
  %44 = vmatpush.msra.mxu0 0.0
  %45 = vmatpush.msra.mxu0 0.0
  %46 = vmatpush.msra.mxu0 0.0
  %47 = vmatpush.msra.mxu0 0.0
  %48 = vmatpush.msra.mxu0 0.0
  %49 = vmatpush.msra.mxu0 0.0
  %50 = vmatpush.msra.mxu0 0.0
  %51 = vmatpush.msra.mxu0 0.0
  %52 = vmatpush.msra.mxu0 0.0
  %53 = vmatpush.msra.mxu0 0.0
  %54 = vmatpush.msra.mxu0 %v32
  %55 = vmatpush.msra.mxu0 %v31
  %56 = vmatmul.f32.gmra.mxu0 %v35
  %v57 = vpop.f32.mrf.mxu0
  %v58 = vadd.f32 0.0, %v57
  %59 = vmatmul.f32.gmra.mxu0 %v38
  %v60 = vpop.f32.mrf.mxu0
  %v61 = vadd.f32 0.0, %v60
  %62 = vdwg.mxu0
  %v63 = vld [vmem:[%s1] sm:$0x3f]
  %v64 = vld [vmem:[%s2] sm:$0x3f]
  %vm65 = vcmask 48128
  %v67 = vsel %vm65, %v31, 0
  %v70 = vsel %vm65, %v32, 0
  %vm72 = vcmask 1045504
  %v74 = vsel %vm72, %v64, 0
  %76 = vmatpush.msra.mxu0 0.0
  %77 = vmatpush.msra.mxu0 0.0
  %78 = vmatpush.msra.mxu0 0.0
  %79 = vmatpush.msra.mxu0 0.0
  %80 = vmatpush.msra.mxu0 0.0
  %81 = vmatpush.msra.mxu0 0.0
  %82 = vmatpush.msra.mxu0 0.0
  %83 = vmatpush.msra.mxu0 0.0
  %84 = vmatpush.msra.mxu0 0.0
  %85 = vmatpush.msra.mxu0 0.0
  %86 = vmatpush.msra.mxu0 0.0
  %87 = vmatpush.msra.mxu0 0.0
  %88 = vmatpush.msra.mxu0 0.0
  %89 = vmatpush.msra.mxu0 0.0
  %90 = vmatpush.msra.mxu0 0.0
  %91 = vmatpush.msra.mxu0 %v74
  %92 = vmatmul.f32.gmra.mxu0 %v67
  %v93 = vpop.f32.mrf.mxu0
  %v94 = vadd.f32 0.0, %v93
  %95 = vmatmul.f32.gmra.mxu0 %v70
  %v96 = vpop.f32.mrf.mxu0
  %v97 = vadd.f32 0.0, %v96
  %98 = vdwg.mxu0
  %v100 = vsel %vm65, %v58, 0
  %v103 = vsel %vm65, %v61, 0
  %v106 = vsel %vm72, %v63, 0
  %108 = vmatpush.msra.mxu0 0.0
  %109 = vmatpush.msra.mxu0 0.0
  %110 = vmatpush.msra.mxu0 0.0
  %111 = vmatpush.msra.mxu0 0.0
  %112 = vmatpush.msra.mxu0 0.0
  %113 = vmatpush.msra.mxu0 0.0
  %114 = vmatpush.msra.mxu0 0.0
  %115 = vmatpush.msra.mxu0 0.0
  %116 = vmatpush.msra.mxu0 0.0
  %117 = vmatpush.msra.mxu0 0.0
  %118 = vmatpush.msra.mxu0 0.0
  %119 = vmatpush.msra.mxu0 0.0
  %120 = vmatpush.msra.mxu0 0.0
  %121 = vmatpush.msra.mxu0 0.0
  %122 = vmatpush.msra.mxu0 0.0
  %123 = vmatpush.msra.mxu0 %v106
  %124 = vmatmul.f32.gmra.mxu0 %v100
  %v125 = vpop.f32.mrf.mxu0
  %v126 = vadd.f32 %v94, %v125
  %127 = vmatmul.f32.gmra.mxu0 %v103
  %v128 = vpop.f32.mrf.mxu0
  %v129 = vadd.f32 %v97, %v128
  %130 = vdwg.mxu0
  %v131 = vld [vmem:[%s3] sm:$0x1]
  %v133 = vperm.slane %v131, 0
  %v135 = vadd.f32 %v126, %v133
  %v136 = vadd.f32 %v129, %v133
  %v137 = vmax.f32 %v135, 0.0
  %v138 = vmax.f32 %v136, 0.0
  %v139 = vld [vmem:[%s4] sm:$0xff]
  %v140 = vld [vmem:[%s4 + $0x8] sm:$0xff]
  %v141 = vld [vmem:[%s4 + $0x10] sm:$0xff]
  %v142 = vld [vmem:[%s4 + $0x18] sm:$0xff]
  %v143 = vld [vmem:[%s4 + $0x20] sm:$0xff]
  %v144 = vld [vmem:[%s4 + $0x28] sm:$0xff]
  %v145 = vld [vmem:[%s4 + $0x30] sm:$0xff]
  %v146 = vld [vmem:[%s4 + $0x38] sm:$0xff]
  %vm147 = vcmask 523264
  %v149 = vsel %vm147, %v137, 0
  %v152 = vsel %vm147, %v138, 0
  %154 = vmatpush.msra.mxu0 0.0
  %155 = vmatpush.msra.mxu0 0.0
  %156 = vmatpush.msra.mxu0 0.0
  %157 = vmatpush.msra.mxu0 0.0
  %158 = vmatpush.msra.mxu0 0.0
  %159 = vmatpush.msra.mxu0 0.0
  %160 = vmatpush.msra.mxu0 0.0
  %161 = vmatpush.msra.mxu0 0.0
  %162 = vmatpush.msra.mxu0 %v146
  %163 = vmatpush.msra.mxu0 %v145
  %164 = vmatpush.msra.mxu0 %v144
  %165 = vmatpush.msra.mxu0 %v143
  %166 = vmatpush.msra.mxu0 %v142
  %167 = vmatpush.msra.mxu0 %v141
  %168 = vmatpush.msra.mxu0 %v140
  %169 = vmatpush.msra.mxu0 %v139
  %170 = vmatmul.f32.gmra.mxu0 %v149
  %v171 = vpop.f32.mrf.mxu0
  %v172 = vadd.f32 0.0, %v171
  %173 = vmatmul.f32.gmra.mxu0 %v152
  %v174 = vpop.f32.mrf.mxu0
  %v175 = vadd.f32 0.0, %v174
  %176 = vdwg.mxu0
  %v177 = vld [vmem:[%s5] sm:$0xff]
  %v178 = vld [vmem:[%s5 + $0x8] sm:$0xff]
  %v179 = vld [vmem:[%s5 + $0x10] sm:$0xff]
  %v180 = vld [vmem:[%s5 + $0x18] sm:$0xff]
  %v181 = vld [vmem:[%s5 + $0x20] sm:$0xff]
  %v182 = vld [vmem:[%s5 + $0x28] sm:$0xff]
  %v183 = vld [vmem:[%s5 + $0x30] sm:$0xff]
  %v184 = vld [vmem:[%s5 + $0x38] sm:$0xff]
  %185 = vmatpush.msra.mxu0 0.0
  %186 = vmatpush.msra.mxu0 0.0
  %187 = vmatpush.msra.mxu0 0.0
  %188 = vmatpush.msra.mxu0 0.0
  %189 = vmatpush.msra.mxu0 0.0
  %190 = vmatpush.msra.mxu0 0.0
  %191 = vmatpush.msra.mxu0 0.0
  %192 = vmatpush.msra.mxu0 0.0
  %193 = vmatpush.msra.mxu0 %v184
  %194 = vmatpush.msra.mxu0 %v183
  %195 = vmatpush.msra.mxu0 %v182
  %196 = vmatpush.msra.mxu0 %v181
  %197 = vmatpush.msra.mxu0 %v180
  %198 = vmatpush.msra.mxu0 %v179
  %199 = vmatpush.msra.mxu0 %v178
  %200 = vmatpush.msra.mxu0 %v177
  %201 = vmatmul.f32.gmra.mxu0 %v149
  %v202 = vpop.f32.mrf.mxu0
  %v203 = vadd.f32 0.0, %v202
  %204 = vmatmul.f32.gmra.mxu0 %v152
  %v205 = vpop.f32.mrf.mxu0
  %v206 = vadd.f32 0.0, %v205
  %207 = vdwg.mxu0
  %208 = vmatpush.msra.mxu0 0.0
  %209 = vmatpush.msra.mxu0 0.0
  %210 = vmatpush.msra.mxu0 0.0
  %211 = vmatpush.msra.mxu0 0.0
  %212 = vmatpush.msra.mxu0 0.0
  %213 = vmatpush.msra.mxu0 0.0
  %214 = vmatpush.msra.mxu0 0.0
  %215 = vmatpush.msra.mxu0 0.0
  %216 = vmatpush.msra.mxu0 0.0
  %217 = vmatpush.msra.mxu0 0.0
  %218 = vmatpush.msra.mxu0 0.0
  %219 = vmatpush.msra.mxu0 0.0
  %220 = vmatpush.msra.mxu0 0.0
  %221 = vmatpush.msra.mxu0 0.0
  %222 = vmatpush.msra.mxu0 %v175
  %223 = vmatpush.msra.mxu0 %v172
  %224 = vmatmul.f32.gmra.mxu0 %v35
  %v225 = vpop.f32.mrf.mxu0
  %v226 = vadd.f32 %v203, %v225
  %227 = vmatmul.f32.gmra.mxu0 %v38
  %v228 = vpop.f32.mrf.mxu0
  %v229 = vadd.f32 %v206, %v228
  %230 = vdwg.mxu0
  %v231 = vld [vmem:[%s6] sm:$0x1]
  %v233 = vperm.slane %v231, 0
  %v235 = vadd.f32 %v226, %v233
  %v236 = vadd.f32 %v229, %v233
  %v237 = vmax.f32 %v235, 0.0
  %v238 = vmax.f32 %v236, 0.0
  %v239 = vadd.f32 %v31, %v237
  %v240 = vadd.f32 %v32, %v238
  %v241 = vmul.f32 %v239, 0.5
  %v242 = vmul.f32 %v240, 0.5
  %243 = vst.msk [vmem:[%s8] sm:$0xff] %vm65, %v241
  %244 = vst.msk [vmem:[%s8 + $0x8] sm:$0xff] %vm65, %v242
  // Predicated region
  $region34: #{tpu_custom_call.1} parent=0 // pred_check
    _
  $region35: #{tpu_custom_call.1} parent=0 // pred_check_branch
    %246 = sbr.rel (0) target = $region37
  $region36: #{tpu_custom_call.1} parent=0 // pred_region
    _
  $region37: #{tpu_custom_call.1} parent=0 // pred_fallthru
    _
  // Predicated region
  $region38: #{tpu_custom_call.1} parent=0 // pred_check
    _
  $region39: #{tpu_custom_call.1} parent=0 // pred_check_branch
    %248 = sbr.rel (0) target = $region41
  $region40: #{tpu_custom_call.1} parent=0 // pred_region
    _
  $region41: #{tpu_custom_call.1} parent=0 // pred_fallthru
    _

</llo_original>
